<compile_context>
chip_gen: v7x
topology: tpu7x:2x2x1
jax: 0.10.0
libtpu: 0.0.40
codegen_flags: <defaults>
</compile_context>

<pallas_src>
import functools

import jax
import jax.numpy as jnp
from jax import lax
from jax.experimental import pallas as pl
from jax.experimental.pallas import tpu as pltpu


def _round_up(n, m):
    return ((n + m - 1) // m) * m


def policy_kernel(x_ref, w1_ref, b1_ref, w2_ref, b2_ref, out_ref, *, out_size):
    x = x_ref[...]

    # Fused first layer for both heads: (TB, in) @ (in, 2H) -> [h_action | h_value]
    h_cat = jnp.dot(x, w1_ref[...], preferred_element_type=jnp.float32) + b1_ref[...]
    h_cat = jnp.maximum(h_cat, 0.0)

    # Fused second layer (block-diagonal weights, lane-padded to OUT_PAD):
    #   cols [0, out_size)        -> action logits
    #   col  out_size             -> critic value
    #   cols (out_size, OUT_PAD)  -> zeros (padding)
    fused = jnp.dot(h_cat, w2_ref[...], preferred_element_type=jnp.float32) + b2_ref[...]

    # Column mask built once per row-vector and broadcast over rows.
    col = lax.broadcasted_iota(jnp.int32, (1, fused.shape[-1]), 1)
    is_logit = col < out_size

    # Numerically stable softmax restricted to the real logit columns.
    masked_logits = jnp.where(is_logit, fused, -jnp.inf)
    m = jnp.max(masked_logits, axis=-1, keepdims=True)
    e = jnp.exp(masked_logits - m)                 # padded cols -> exp(-inf) = 0
    denom = jnp.sum(e, axis=-1, keepdims=True)
    probs = e / denom                              # exact division (meets 1e-5 atol)

    # Single lane-dense store: probs in logit columns, raw fused value / zero
    # padding elsewhere.
    out_ref[...] = jnp.where(is_logit, probs, fused)


def pack_policy_params(params):
    """Build the fused / lane-padded weights ONCE (hoisted out of the forward)."""
    (w1, b1, w2, b2, v1, c1, v2, c2) = params
    in_size, hidden = w1.shape
    out_size = w2.shape[1]
    out_pad = _round_up(out_size + 1, 128)

    w1cat = jnp.concatenate([w1, v1], axis=1)                 # (in, 2H)
    b1cat = jnp.concatenate([b1, c1], axis=1)                 # (1, 2H)
    w2cat = jnp.zeros((2 * hidden, out_pad), jnp.float32)     # block-diagonal
    w2cat = w2cat.at[:hidden, :out_size].set(w2)
    w2cat = w2cat.at[hidden:, out_size:out_size + 1].set(v2)
    b2cat = jnp.zeros((1, out_pad), jnp.float32)
    b2cat = b2cat.at[:, :out_size].set(b2)
    b2cat = b2cat.at[:, out_size:out_size + 1].set(c2)

    return {
        "w1cat": w1cat, "b1cat": b1cat, "w2cat": w2cat, "b2cat": b2cat,
        "in_size": in_size, "hidden": hidden,
        "out_size": out_size, "out_pad": out_pad,
    }


def policy_forward(x, packed, *, block_b=1024):
    B, in_size = x.shape
    assert in_size == packed["in_size"]
    hidden = packed["hidden"]
    out_size = packed["out_size"]
    out_pad = packed["out_pad"]
    w1cat, b1cat = packed["w1cat"], packed["b1cat"]
    w2cat, b2cat = packed["w2cat"], packed["b2cat"]

    # ---- batch tiling ----
    # >=2 grid steps whenever B > 8 (v7x megacore), and tb ~ ceil(B / n_steps)
    # so batch padding stays tight instead of padding up to a fixed 512/1024.
    n_steps = pl.cdiv(B, block_b)
    if B > 8:
        n_steps = max(n_steps, 2)
    tb = _round_up(pl.cdiv(B, n_steps), 8)
    b_pad = _round_up(B, tb)
    x_padded = jnp.pad(x, ((0, b_pad - B), (0, 0))) if b_pad != B else x
    grid = (b_pad // tb,)

    # ---- scoped VMEM sizing (v5e default is only 16 MiB) ----
    weight_bytes = 4 * (w1cat.size + b1cat.size + w2cat.size + b2cat.size)
    tile_bytes = 4 * (tb * in_size + tb * out_pad)
    est_bytes = 2 * (weight_bytes + tile_bytes)          # double-buffered
    vmem_limit = int(min(64 * 1024 * 1024, max(2 * est_bytes, 8 * 1024 * 1024)))

    resident = lambda i: (0, 0)   # weights/biases stay in VMEM across grid steps
    kernel = functools.partial(policy_kernel, out_size=out_size)

    out = pl.pallas_call(
        kernel,
        out_shape=jax.ShapeDtypeStruct((b_pad, out_pad), jnp.float32),
        grid=grid,
        in_specs=[
            pl.BlockSpec((tb, in_size), lambda i: (i, 0)),
            pl.BlockSpec((in_size, 2 * hidden), resident),
            pl.BlockSpec((1, 2 * hidden), resident),
            pl.BlockSpec((2 * hidden, out_pad), resident),
            pl.BlockSpec((1, out_pad), resident),
        ],
        out_specs=pl.BlockSpec((tb, out_pad), lambda i: (i, 0)),
        compiler_params=pltpu.CompilerParams(
            dimension_semantics=("parallel",),
            vmem_limit_bytes=vmem_limit,
        ),
    )(x_padded, w1cat, b1cat, w2cat, b2cat)

    probs = out[:B, :out_size]
    value = out[:B, out_size:out_size + 1]
    return probs, value


def policy_reference(x, params):
    (w1, b1, w2, b2, v1, c1, v2, c2) = params
    h = jnp.maximum(x @ w1 + b1, 0.0)
    probs = jax.nn.softmax(h @ w2 + b2, axis=-1)
    hv = jnp.maximum(x @ v1 + c1, 0.0)
    value = hv @ v2 + c2
    return probs, value


def init_params(key, in_size, hidden_size, out_size):
    # Deterministic init mimicking PyTorch Linear default:
    # U(-1/sqrt(fan_in), +1/sqrt(fan_in))
    ks = jax.random.split(key, 8)

    def lin(kw, kb, fan_in, fan_out):
        bound = 1.0 / jnp.sqrt(float(fan_in))
        w = jax.random.uniform(kw, (fan_in, fan_out), jnp.float32, -bound, bound)
        b = jax.random.uniform(kb, (1, fan_out), jnp.float32, -bound, bound)
        return w, b

    w1, b1 = lin(ks[0], ks[1], in_size, hidden_size)
    w2, b2 = lin(ks[2], ks[3], hidden_size, out_size)
    v1, c1 = lin(ks[4], ks[5], in_size, hidden_size)
    v2, c2 = lin(ks[6], ks[7], hidden_size, 1)
    return (w1, b1, w2, b2, v1, c1, v2, c2)


if __name__ == "__main__":
    key = jax.random.PRNGKey(0)
    k_x, k_p = jax.random.split(key)

    B, in_size, hidden_size, out_size = 8, 16, 32, 4
    x = jax.random.normal(k_x, (B, in_size), jnp.float32)
    params = init_params(k_p, in_size, hidden_size, out_size)

    packed = pack_policy_params(params)          # one-time weight packing
    probs, value = policy_forward(x, packed)
    jax.block_until_ready((probs, value))

    # sanity: shapes, softmax rows sum to ~1, matches pure-JAX reference
    assert probs.shape == (B, out_size)
    assert value.shape == (B, 1)
    assert jnp.allclose(jnp.sum(probs, axis=-1), 1.0, atol=1e-5)

    ref_probs, ref_value = policy_reference(x, params)
    assert jnp.allclose(probs, ref_probs, atol=1e-5)
    assert jnp.allclose(value, ref_value, atol=1e-5)

    print("KERNEL_OK")
</pallas_src>

<mosaic_0001>
module attributes {stable_mosaic.version = 11 : i64} {
  func.func @policy_kernel(%arg0: i32, %arg1: memref<8x16xf32, #tpu.memory_space<vmem>>, %arg2: memref<16x64xf32, #tpu.memory_space<vmem>>, %arg3: memref<1x64xf32, #tpu.memory_space<vmem>>, %arg4: memref<64x128xf32, #tpu.memory_space<vmem>>, %arg5: memref<1x128xf32, #tpu.memory_space<vmem>>, %arg6: memref<8x128xf32, #tpu.memory_space<vmem>>) attributes {dimension_semantics = [#tpu.dimension_semantics<parallel>], iteration_bounds = array<i64: 1>, scalar_prefetch = 0 : i64, scratch_operands = 0 : i64, tpu.core_type = #tpu.core_type<tc>, window_params = [{transform_indices = @transform_0, window_bounds = array<i64: 8, 16>}, {pipeline_mode = #tpu.pipeline_mode<synchronous>, transform_indices = @transform_1, window_bounds = array<i64: 16, 64>}, {pipeline_mode = #tpu.pipeline_mode<synchronous>, transform_indices = @transform_2, window_bounds = array<i64: 1, 64>}, {pipeline_mode = #tpu.pipeline_mode<synchronous>, transform_indices = @transform_3, window_bounds = array<i64: 64, 128>}, {pipeline_mode = #tpu.pipeline_mode<synchronous>, transform_indices = @transform_4, window_bounds = array<i64: 1, 128>}, {transform_indices = @transform_5, window_bounds = array<i64: 8, 128>}]} {
    %c0 = arith.constant 0 : index
    %c0_0 = arith.constant 0 : index
    %0 = vector.load %arg1[%c0, %c0_0] : memref<8x16xf32, #tpu.memory_space<vmem>>, vector<8x16xf32>
    %c0_1 = arith.constant 0 : index
    %c0_2 = arith.constant 0 : index
    %1 = vector.load %arg2[%c0_1, %c0_2] : memref<16x64xf32, #tpu.memory_space<vmem>>, vector<16x64xf32>
    %cst = arith.constant dense<0.000000e+00> : vector<8x64xf32>
    %2 = tpu.matmul %0, %1, %cst {dimension_numbers = #tpu.dot_dimension_numbers<[1], [0], [0], [1], [0, 0, 1, 1], [], []>} : vector<8x16xf32>, vector<16x64xf32>, vector<8x64xf32> -> vector<8x64xf32>
    %c0_3 = arith.constant 0 : index
    %c0_4 = arith.constant 0 : index
    %3 = vector.load %arg3[%c0_3, %c0_4] : memref<1x64xf32, #tpu.memory_space<vmem>>, vector<1x64xf32>
    %4 = vector.broadcast %3 : vector<1x64xf32> to vector<8x64xf32>
    %5 = arith.addf %2, %4 : vector<8x64xf32>
    %cst_5 = arith.constant 0.000000e+00 : f32
    %6 = vector.broadcast %cst_5 : f32 to vector<8x64xf32>
    %7 = arith.maximumf %5, %6 : vector<8x64xf32>
    %c0_6 = arith.constant 0 : index
    %c0_7 = arith.constant 0 : index
    %8 = vector.load %arg4[%c0_6, %c0_7] : memref<64x128xf32, #tpu.memory_space<vmem>>, vector<64x128xf32>
    %cst_8 = arith.constant dense<0.000000e+00> : vector<8x128xf32>
    %9 = tpu.matmul %7, %8, %cst_8 {dimension_numbers = #tpu.dot_dimension_numbers<[1], [0], [0], [1], [0, 0, 1, 1], [], []>} : vector<8x64xf32>, vector<64x128xf32>, vector<8x128xf32> -> vector<8x128xf32>
    %c0_9 = arith.constant 0 : index
    %c0_10 = arith.constant 0 : index
    %10 = vector.load %arg5[%c0_9, %c0_10] : memref<1x128xf32, #tpu.memory_space<vmem>>, vector<1x128xf32>
    %11 = vector.broadcast %10 : vector<1x128xf32> to vector<8x128xf32>
    %12 = arith.addf %9, %11 : vector<8x128xf32>
    %13 = tpu.iota {dimensions = array<i32: 1>} : vector<1x128xi32>
    %c4_i32 = arith.constant 4 : i32
    %14 = vector.broadcast %c4_i32 : i32 to vector<1x128xi32>
    %15 = arith.cmpi slt, %13, %14 : vector<1x128xi32>
    %cst_11 = arith.constant 0xFF800000 : f32
    %16 = vector.shape_cast %15 : vector<1x128xi1> to vector<1x128xi1>
    %17 = vector.broadcast %16 : vector<1x128xi1> to vector<8x128xi1>
    %18 = vector.broadcast %cst_11 : f32 to vector<8x128xf32>
    %19 = arith.select %17, %12, %18 : vector<8x128xi1>, vector<8x128xf32>
    %cst_12 = arith.constant dense<0xFF800000> : vector<8xf32>
    %20 = vector.multi_reduction <maximumf>, %19, %cst_12 [1] : vector<8x128xf32> to vector<8xf32>
    %21 = vector.shape_cast %20 : vector<8xf32> to vector<8x1xf32>
    %22 = vector.broadcast %21 : vector<8x1xf32> to vector<8x128xf32>
    %23 = arith.subf %19, %22 : vector<8x128xf32>
    %24 = math.exp %23 : vector<8x128xf32>
    %cst_13 = arith.constant dense<0.000000e+00> : vector<8xf32>
    %25 = vector.multi_reduction <add>, %24, %cst_13 [1] : vector<8x128xf32> to vector<8xf32>
    %26 = vector.shape_cast %25 : vector<8xf32> to vector<8x1xf32>
    %27 = vector.broadcast %26 : vector<8x1xf32> to vector<8x128xf32>
    %28 = arith.divf %24, %27 : vector<8x128xf32>
    %29 = vector.shape_cast %15 : vector<1x128xi1> to vector<1x128xi1>
    %30 = vector.broadcast %29 : vector<1x128xi1> to vector<8x128xi1>
    %31 = arith.select %30, %28, %12 : vector<8x128xi1>, vector<8x128xf32>
    %c0_14 = arith.constant 0 : index
    %c0_15 = arith.constant 0 : index
    %32 = vector.load %arg6[%c0_14, %c0_15] : memref<8x128xf32, #tpu.memory_space<vmem>>, vector<8x128xf32>
    tpu.vector_store %arg6[%c0_14, %c0_15], %31 {strides = array<i32>} : memref<8x128xf32, #tpu.memory_space<vmem>>, vector<8x128xf32>,
    return
  }
  func.func @transform_0(%arg0: i32) -> (i32, i32) {
    %c0_i32 = arith.constant 0 : i32
    %c0_i32_0 = arith.constant 0 : i32
    return %arg0, %c0_i32 : i32, i32
  }
  func.func @transform_1(%arg0: i32) -> (i32, i32) {
    %c0_i32 = arith.constant 0 : i32
    %c0_i32_0 = arith.constant 0 : i32
    %c0_i32_1 = arith.constant 0 : i32
    return %c0_i32, %c0_i32_0 : i32, i32
  }
  func.func @transform_2(%arg0: i32) -> (i32, i32) {
    %c0_i32 = arith.constant 0 : i32
    %c0_i32_0 = arith.constant 0 : i32
    %c0_i32_1 = arith.constant 0 : i32
    return %c0_i32, %c0_i32_0 : i32, i32
  }
  func.func @transform_3(%arg0: i32) -> (i32, i32) {
    %c0_i32 = arith.constant 0 : i32
    %c0_i32_0 = arith.constant 0 : i32
    %c0_i32_1 = arith.constant 0 : i32
    return %c0_i32, %c0_i32_0 : i32, i32
  }
  func.func @transform_4(%arg0: i32) -> (i32, i32) {
    %c0_i32 = arith.constant 0 : i32
    %c0_i32_0 = arith.constant 0 : i32
    %c0_i32_1 = arith.constant 0 : i32
    return %c0_i32, %c0_i32_0 : i32, i32
  }
  func.func @transform_5(%arg0: i32) -> (i32, i32) {
    %c0_i32 = arith.constant 0 : i32
    %c0_i32_0 = arith.constant 0 : i32
    return %arg0, %c0_i32 : i32, i32
  }
}

</mosaic_0001>

<llo_original>
// kernel: tpu_custom_call.1
$region0: #{tpu_custom_call.1}
  #allocation0 [shape = 'u32[]', space=smem, size = 0x4, offset = 0x4, fixed_abs, tag = 'smem constant byte address 0x4 - core index']
  #allocation1 [shape = 'u32[144,128]{1,0:T(1,128)}', space=vmem, size = 0x12000, scoped, tag = 'internal scratch']
  %s0 = inlined_call_operand.hbm [shape: f32[8,16], index: 0, kind: input, shape index: {}]
  %s1 = inlined_call_operand.hbm [shape: f32[16,64], index: 1, kind: input, shape index: {}]
  %s2 = inlined_call_operand.vmem [shape: f32[1,64], index: 2, kind: input, shape index: {}]
  %s3 = inlined_call_operand.hbm [shape: f32[64,128], index: 3, kind: input, shape index: {}]
  %s4 = inlined_call_operand.vmem [shape: f32[1,128], index: 4, kind: input, shape index: {}]
  %s5 = inlined_call_operand.hbm [shape: f32[8,128], index: 5, kind: output, shape index: {}]
  %s6 = sld [smem:[#allocation0]]
  $region42: #{tpu_custom_call.1} parent=0
    _
  %s8 = ssub.s32 1, %s6
  %s9 = scalar_select 0, %s8, %s6
  $region1: #{tpu_custom_call.1} parent=0
    #allocation2 [shape = 'u8[4096]{0}', space=vmem, size = 0x1000, scoped, tag = 'input window, operand 0, single buffered']
    #allocation3 [shape = 's32[1]{0}', space=sflag, size = 0x4, scoped, tag = 'scoped memory for tpu_custom_call.1']
    #allocation4 [shape = 's32[1]{0}', space=sflag, size = 0x4, scoped, tag = 'scoped memory for tpu_custom_call.1']
    #allocation5 [shape = 'u8[8192]{0}', space=vmem, size = 0x2000, scoped, tag = 'input window, operand 1, single buffered']
    #allocation6 [shape = 's32[1]{0}', space=sflag, size = 0x4, scoped, tag = 'scoped memory for tpu_custom_call.1']
    #allocation7 [shape = 'u8[32768]{0}', space=vmem, size = 0x8000, scoped, tag = 'input window, operand 3, single buffered']
    #allocation8 [shape = 'u8[4096]{0}', space=vmem, size = 0x1000, scoped, tag = 'output window, operand 0, single buffered']
    %10 = vsyncpa [#allocation3], 0
    %11 = vsyncpa [#allocation6], 0
    %12 = vsyncpa [#allocation4], 0
    // Predicated region
    $region2: #{tpu_custom_call.1} parent=1 // pred_check
      _
    $region3: #{tpu_custom_call.1} parent=1 // pred_check_branch
      %14 = sbr.rel (0) target = $region5
    $region4: #{tpu_custom_call.1} parent=1 // pred_region
      %s16 = ssub.s32 128, 128
      %17 = vsyncadd [#allocation3], %s16
      %s19 = sshll.u32 [#allocation2], 4
      %s20 = int_to_ptr.vmem [resolvable:$true] %s19
      %22 = dma.hbm_to_vmem [thread:$0]  %s0, 128, %s20, [#allocation3]
    $region5: #{tpu_custom_call.1} parent=1 // pred_fallthru
      _
    // Predicated region
    $region6: #{tpu_custom_call.1} parent=1 // pred_check
      _
    $region7: #{tpu_custom_call.1} parent=1 // pred_check_branch
      %24 = sbr.rel (0) target = $region9
    $region8: #{tpu_custom_call.1} parent=1 // pred_region
      %s26 = ssub.s32 256, 256
      %27 = vsyncadd [#allocation6], %s26
      %s28 = sshll.u32 [#allocation5], 4
      %s29 = int_to_ptr.vmem [resolvable:$true] %s28
      %34 = dma.hbm_to_vmem [thread:$0]  %s1, 256, %s29, [#allocation6], 128, 128, 8
    $region9: #{tpu_custom_call.1} parent=1 // pred_fallthru
      _
    // Predicated region
    $region10: #{tpu_custom_call.1} parent=1 // pred_check
      _
    $region11: #{tpu_custom_call.1} parent=1 // pred_check_branch
      %36 = sbr.rel (0) target = $region13
    $region12: #{tpu_custom_call.1} parent=1 // pred_region
      _
    $region13: #{tpu_custom_call.1} parent=1 // pred_fallthru
      _
    // Predicated region
    $region14: #{tpu_custom_call.1} parent=1 // pred_check
      _
    $region15: #{tpu_custom_call.1} parent=1 // pred_check_branch
      %38 = sbr.rel (0) target = $region17
    $region16: #{tpu_custom_call.1} parent=1 // pred_region
      %s40 = ssub.s32 1024, 1024
      %41 = vsyncadd [#allocation6], %s40
      %s42 = sshll.u32 [#allocation7], 4
      %s43 = int_to_ptr.vmem [resolvable:$true] %s42
      %48 = dma.hbm_to_vmem [thread:$0]  %s3, 1024, %s43, [#allocation6], 128, 128, 8
    $region17: #{tpu_custom_call.1} parent=1 // pred_fallthru
      _
    // Predicated region
    $region18: #{tpu_custom_call.1} parent=1 // pred_check
      _
    $region19: #{tpu_custom_call.1} parent=1 // pred_check_branch
      %50 = sbr.rel (0) target = $region21
    $region20: #{tpu_custom_call.1} parent=1 // pred_region
      _
    $region21: #{tpu_custom_call.1} parent=1 // pred_fallthru
      _
    // Predicated region
    $region22: #{tpu_custom_call.1} parent=1 // pred_check
      _
    $region23: #{tpu_custom_call.1} parent=1 // pred_check_branch
      %52 = sbr.rel (0) target = $region25
    $region24: #{tpu_custom_call.1} parent=1 // pred_region
      %53 = dma.done [#allocation3], 128
    $region25: #{tpu_custom_call.1} parent=1 // pred_fallthru
      _
    // Predicated region
    $region26: #{tpu_custom_call.1} parent=1 // pred_check
      _
    $region27: #{tpu_custom_call.1} parent=1 // pred_check_branch
      %55 = sbr.rel (0) target = $region29
    $region28: #{tpu_custom_call.1} parent=1 // pred_region
      %56 = dma.done [#allocation6], 256
    $region29: #{tpu_custom_call.1} parent=1 // pred_fallthru
      _
    // Predicated region
    $region30: #{tpu_custom_call.1} parent=1 // pred_check
      _
    $region31: #{tpu_custom_call.1} parent=1 // pred_check_branch
      %58 = sbr.rel (0) target = $region33
    $region32: #{tpu_custom_call.1} parent=1 // pred_region
      %59 = dma.done [#allocation6], 1024
    $region33: #{tpu_custom_call.1} parent=1 // pred_fallthru
      _
    %v60 = vld [vmem:[#allocation2] sm:$0xff]
    %v61 = vld [vmem:[#allocation5] sm:$0xff]
    %v62 = vld [vmem:[#allocation5 + $0x8] sm:$0xff]
    %v63 = vld [vmem:[%s2] sm:$0x1]
    %v65 = vlaneseq
    %v66 = vshrl.u32 %v65, 7
    %v67 = vsub.s32 0, %v66
    %v68 = vrot.slane %v63, %v67
    %vm70 = vcmask 130048
    %v72 = vsel %vm70, %v60, 0
    %74 = vmatprep.subr.mxu0 0.0
    %75 = vmatpush1.msra.mxu0 %v61
    %76 = vmatprep.subr.mxu0 0.0
    %77 = vmatpush1.msra.mxu0 %v62
    %78 = vmatprep.subr.mxu0 0.0
    %79 = vmatpush1.msra.mxu0 0.0
    %80 = vmatprep.subr.mxu0 0.0
    %81 = vmatpush1.msra.mxu0 0.0
    %82 = vmatprep.subr.mxu0 0.0
    %83 = vmatpush1.msra.mxu0 0.0
    %84 = vmatprep.subr.mxu0 0.0
    %85 = vmatpush1.msra.mxu0 0.0
    %86 = vmatprep.subr.mxu0 0.0
    %87 = vmatpush1.msra.mxu0 0.0
    %88 = vmatprep.subr.mxu0 0.0
    %89 = vmatpush1.msra.mxu0 0.0
    %90 = vmatprep.subr.mxu0 0.0
    %91 = vmatpush1.msra.mxu0 0.0
    %92 = vmatprep.subr.mxu0 0.0
    %93 = vmatpush1.msra.mxu0 0.0
    %94 = vmatprep.subr.mxu0 0.0
    %95 = vmatpush1.msra.mxu0 0.0
    %96 = vmatprep.subr.mxu0 0.0
    %97 = vmatpush1.msra.mxu0 0.0
    %98 = vmatprep.subr.mxu0 0.0
    %99 = vmatpush1.msra.mxu0 0.0
    %100 = vmatprep.subr.mxu0 0.0
    %101 = vmatpush1.msra.mxu0 0.0
    %102 = vmatprep.subr.mxu0 0.0
    %103 = vmatpush1.msra.mxu0 0.0
    %104 = vmatprep.subr.mxu0 0.0
    %105 = vmatpush1.msra.mxu0 0.0
    %106 = vmatprep.subr.mxu0 0.0
    %107 = vmatpush1.msra.mxu0 0.0
    %108 = vmatprep.subr.mxu0 0.0
    %109 = vmatpush1.msra.mxu0 0.0
    %110 = vmatprep.subr.mxu0 0.0
    %111 = vmatpush1.msra.mxu0 0.0
    %112 = vmatprep.subr.mxu0 0.0
    %113 = vmatpush1.msra.mxu0 0.0
    %114 = vmatprep.subr.mxu0 0.0
    %115 = vmatpush1.msra.mxu0 0.0
    %116 = vmatprep.subr.mxu0 0.0
    %117 = vmatpush1.msra.mxu0 0.0
    %118 = vmatprep.subr.mxu0 0.0
    %119 = vmatpush1.msra.mxu0 0.0
    %120 = vmatprep.subr.mxu0 0.0
    %121 = vmatpush1.msra.mxu0 0.0
    %122 = vmatprep.subr.mxu0 0.0
    %123 = vmatpush1.msra.mxu0 0.0
    %124 = vmatprep.subr.mxu0 0.0
    %125 = vmatpush1.msra.mxu0 0.0
    %126 = vmatprep.subr.mxu0 0.0
    %127 = vmatpush1.msra.mxu0 0.0
    %128 = vmatprep.subr.mxu0 0.0
    %129 = vmatpush1.msra.mxu0 0.0
    %130 = vmatprep.subr.mxu0 0.0
    %131 = vmatpush1.msra.mxu0 0.0
    %132 = vmatprep.subr.mxu0 0.0
    %133 = vmatpush1.msra.mxu0 0.0
    %134 = vmatprep.subr.mxu0 0.0
    %135 = vmatpush1.msra.mxu0 0.0
    %136 = vmatprep.subr.mxu0 0.0
    %137 = vmatpush1.msra.mxu0 0.0
    %138 = vmatprep.mubr.f32.mxu0 0.0
    %139 = vmatmul.mubr.f32.gmra.mrb[0].mxu0 %v72
    %v140 = vpop.f32.mrb[0].mxu0
    %v141 = vadd.f32 %v68, %v140
    %v142 = vpop.f32.mrb[0].mxu0
    %143 = vdwg.mxu0
    %v144 = vmax.f32 %v141, 0.0
    %v145 = vld [vmem:[#allocation7] sm:$0xff]
    %v146 = vld [vmem:[#allocation7 + $0x8] sm:$0xff]
    %v147 = vld [vmem:[#allocation7 + $0x10] sm:$0xff]
    %v148 = vld [vmem:[#allocation7 + $0x18] sm:$0xff]
    %v149 = vld [vmem:[#allocation7 + $0x20] sm:$0xff]
    %v150 = vld [vmem:[#allocation7 + $0x28] sm:$0xff]
    %v151 = vld [vmem:[#allocation7 + $0x30] sm:$0xff]
    %v152 = vld [vmem:[#allocation7 + $0x38] sm:$0xff]
    %v153 = vld [vmem:[%s4] sm:$0x1]
    %v155 = vlaneseq
    %v156 = vshrl.u32 %v155, 7
    %v157 = vsub.s32 0, %v156
    %v158 = vrot.slane %v153, %v157
    %vm160 = vcmask 523264
    %v162 = vsel %vm160, %v144, 0
    %164 = vmatprep.subr.mxu0 0.0
    %165 = vmatpush1.msra.mxu0 %v145
    %166 = vmatprep.subr.mxu0 0.0
    %167 = vmatpush1.msra.mxu0 %v146
    %168 = vmatprep.subr.mxu0 0.0
    %169 = vmatpush1.msra.mxu0 %v147
    %170 = vmatprep.subr.mxu0 0.0
    %171 = vmatpush1.msra.mxu0 %v148
    %172 = vmatprep.subr.mxu0 0.0
    %173 = vmatpush1.msra.mxu0 %v149
    %174 = vmatprep.subr.mxu0 0.0
    %175 = vmatpush1.msra.mxu0 %v150
    %176 = vmatprep.subr.mxu0 0.0
    %177 = vmatpush1.msra.mxu0 %v151
    %178 = vmatprep.subr.mxu0 0.0
    %179 = vmatpush1.msra.mxu0 %v152
    %180 = vmatprep.subr.mxu0 0.0
    %181 = vmatpush1.msra.mxu0 0.0
    %182 = vmatprep.subr.mxu0 0.0
    %183 = vmatpush1.msra.mxu0 0.0
    %184 = vmatprep.subr.mxu0 0.0
    %185 = vmatpush1.msra.mxu0 0.0
    %186 = vmatprep.subr.mxu0 0.0
    %187 = vmatpush1.msra.mxu0 0.0
    %188 = vmatprep.subr.mxu0 0.0
    %189 = vmatpush1.msra.mxu0 0.0
    %190 = vmatprep.subr.mxu0 0.0
    %191 = vmatpush1.msra.mxu0 0.0
    %192 = vmatprep.subr.mxu0 0.0
    %193 = vmatpush1.msra.mxu0 0.0
    %194 = vmatprep.subr.mxu0 0.0
    %195 = vmatpush1.msra.mxu0 0.0
    %196 = vmatprep.subr.mxu0 0.0
    %197 = vmatpush1.msra.mxu0 0.0
    %198 = vmatprep.subr.mxu0 0.0
    %199 = vmatpush1.msra.mxu0 0.0
    %200 = vmatprep.subr.mxu0 0.0
    %201 = vmatpush1.msra.mxu0 0.0
    %202 = vmatprep.subr.mxu0 0.0
    %203 = vmatpush1.msra.mxu0 0.0
    %204 = vmatprep.subr.mxu0 0.0
    %205 = vmatpush1.msra.mxu0 0.0
    %206 = vmatprep.subr.mxu0 0.0
    %207 = vmatpush1.msra.mxu0 0.0
    %208 = vmatprep.subr.mxu0 0.0
    %209 = vmatpush1.msra.mxu0 0.0
    %210 = vmatprep.subr.mxu0 0.0
    %211 = vmatpush1.msra.mxu0 0.0
    %212 = vmatprep.subr.mxu0 0.0
    %213 = vmatpush1.msra.mxu0 0.0
    %214 = vmatprep.subr.mxu0 0.0
    %215 = vmatpush1.msra.mxu0 0.0
    %216 = vmatprep.subr.mxu0 0.0
    %217 = vmatpush1.msra.mxu0 0.0
    %218 = vmatprep.subr.mxu0 0.0
    %219 = vmatpush1.msra.mxu0 0.0
    %220 = vmatprep.subr.mxu0 0.0
    %221 = vmatpush1.msra.mxu0 0.0
    %222 = vmatprep.subr.mxu0 0.0
    %223 = vmatpush1.msra.mxu0 0.0
    %224 = vmatprep.subr.mxu0 0.0
    %225 = vmatpush1.msra.mxu0 0.0
    %226 = vmatprep.subr.mxu0 0.0
    %227 = vmatpush1.msra.mxu0 0.0
    %228 = vmatprep.mubr.f32.mxu0 0.0
    %229 = vmatmul.mubr.f32.gmra.mrb[0].mxu0 %v162
    %v230 = vpop.f32.mrb[0].mxu0
    %v231 = vadd.f32 %v158, %v230
    %v232 = vpop.f32.mrb[0].mxu0
    %233 = vdwg.mxu0
    %v234 = vlaneseq
    %v235 = vand.u32 %v234, 127
    %vm236 = vcmp.lt.s32.totalorder %v235, 4
    %v237 = vsel %vm236, 1, 0
    %vm238 = vcmp.eq.s32.totalorder %v237, 1
    %v239 = vsel %vm238, %v231, -inf
    %240 = vmax.xlane.f32.xlu0 %v239
    %v241 = vpop.xlane.xlu0 %240
    %v242 = vsub.f32 %v239, %v241
    %v243 = vmul.f32 %v242, 1.442695
    %v244 = vpow.pop %v243
    %245 = vadd.xlane.f32.xlu0 %v244
    %v246 = vpop.xlane.xlu0 %245
    %v247 = vrcp.pop %v246
    %v248 = vmul.f32 %v244, %v247
    %v249 = vsel %vm238, %v248, %v231
    %250 = vst [vmem:[#allocation8] sm:$0xff] %v249
    // Predicated region
    $region34: #{tpu_custom_call.1} parent=1 // pred_check
      _
    $region35: #{tpu_custom_call.1} parent=1 // pred_check_branch
      %252 = sbr.rel (0) target = $region37
    $region36: #{tpu_custom_call.1} parent=1 // pred_region
      %s254 = ssub.s32 128, 128
      %255 = vsyncadd [#allocation4], %s254
      %s257 = sshll.u32 [#allocation8], 4
      %s258 = int_to_ptr.vmem [resolvable:$true] %s257
      %260 = dma.vmem_to_hbm [thread:$0]  %s258, 128, %s5, [#allocation4]
    $region37: #{tpu_custom_call.1} parent=1 // pred_fallthru
      _
    // Predicated region
    $region38: #{tpu_custom_call.1} parent=1 // pred_check
      _
    $region39: #{tpu_custom_call.1} parent=1 // pred_check_branch
      %262 = sbr.rel (0) target = $region41
    $region40: #{tpu_custom_call.1} parent=1 // pred_region
      %263 = dma.done [#allocation4], 128
    $region41: #{tpu_custom_call.1} parent=1 // pred_fallthru
      _
    %264 = vsyncpa [#allocation3], 1
    %265 = vsyncpa [#allocation6], 1
    %266 = vsyncpa [#allocation4], 1

</llo_original>
